<compile_context>
chip_gen: v7x
topology: tpu7x:2x2x1
jax: 0.10.0
libtpu: 0.0.40
codegen_flags: <defaults>
</compile_context>

<pallas_src>
import jax
import jax.numpy as jnp
from jax.experimental import pallas as pl
from jax.experimental.pallas import tpu as pltpu


def _round_up(a, b):
    return (a + b - 1) // b * b


def _cdiv(a, b):
    return (a + b - 1) // b


def _make_kernel(n_taps, c_in, tq, p_halo):
    def kernel(x_ref, xp_ref, w_ref, b_ref, o_ref):
        # x_ref : (1, TQ, Cin)   current time-tile               (model dtype)
        # xp_ref: (1, P,  Cin)   last P rows of the previous tile (model dtype)
        # w_ref : (n_taps*Cin, Npad)  fused weight, resident      (model dtype)
        # b_ref : (1, Npad)      fused bias (f32), resident
        # o_ref : (1, TQ, Npad)  phase-packed output (lane-dense)
        x_blk = x_ref[0]                                            # (TQ, Cin)
        acc = jnp.dot(x_blk, w_ref[pl.ds(0, c_in), :],
                      preferred_element_type=jnp.float32)           # tap j = 0
        if n_taps > 1:
            t = pl.program_id(1)
            prev = xp_ref[0]                                        # (P, Cin)
            # First tile of each batch has no left context -> zeros.
            prev = jnp.where(t > 0, prev, jnp.zeros_like(prev))
            for j in range(1, n_taps):
                # Rows for tap j: x[q - j]  ->  j rows from the halo tail, the
                # rest from the current tile (static slices, in-VMEM only).
                xs = jnp.concatenate(
                    [prev[p_halo - j:, :], x_blk[: tq - j, :]], axis=0)
                acc = acc + jnp.dot(xs, w_ref[pl.ds(j * c_in, c_in), :],
                                    preferred_element_type=jnp.float32)
        o_ref[0] = (acc + b_ref[...]).astype(o_ref.dtype)

    return kernel


def causal_conv_transpose_1d_nlc(x_blc, weight, bias, stride, *,
                                 block_q=None, compute_dtype=None):
    """Channels-last causal ConvTranspose1d.

    x_blc : (B, T, C_in)           channels-last activations
    weight: (C_in, C_out, K)       PyTorch ConvTranspose1d weight layout
    bias  : (C_out,)
    returns (B, T*stride, C_out)   channels-last
    """
    B, T, Cin = x_blc.shape
    Cin_w, Cout, K = weight.shape
    assert Cin == Cin_w
    # Causal crop to T*stride assumes the full conv output is at least that
    # long, i.e. kernel_size >= stride (true for soundstream's K = 2*stride).
    assert K >= stride, "causal crop to T*stride assumes kernel_size >= stride"

    n_taps = _cdiv(K, stride)              # taps folded in-kernel
    Ktot = n_taps * Cin                    # fused contraction dim
    N = stride * Cout                      # phase-packed output width
    Npad = _round_up(N, 128)               # lane-dense (unmasked) stores
    P = max(8, _round_up(max(n_taps - 1, 1), 8))   # halo rows (sublane-aligned)

    dtype = jnp.dtype(x_blc.dtype if compute_dtype is None else compute_dtype)
    x_blc = x_blc.astype(dtype)
    itemsize = dtype.itemsize

    # --- fused weight / bias (tiny, built once) ------------------------------
    # W_comb[j*Cin + ci, p*Cout + co] = w[ci, co, j*stride + p]  (0 if k >= K)
    # NOTE: w_comb is cast to the activation/compute dtype; with bf16
    # activations this is intentionally lower precision than f32 PyTorch.
    w_pad = jnp.pad(weight, ((0, 0), (0, 0), (0, n_taps * stride - K)))
    w_comb = jnp.transpose(
        w_pad.reshape(Cin, Cout, n_taps, stride), (2, 0, 3, 1)).reshape(Ktot, N)
    w_comb = jnp.pad(w_comb, ((0, 0), (0, Npad - N))).astype(dtype)
    b_comb = jnp.pad(jnp.tile(bias.astype(jnp.float32), stride),
                     (0, Npad - N)).reshape(1, Npad)

    # --- per-generation VMEM budget ------------------------------------------
    try:
        vmem_cap = int(pltpu.get_tpu_info().vmem_capacity_bytes)
    except Exception:
        vmem_cap = 64 << 20                # conservative (v7x per-TC size)
    vmem_ceiling = int(vmem_cap * 0.8)     # v7x: ~51 MiB, v5e/v6e: ~102 MiB

    # resident (grid-invariant) buffers: fused weight + bias + halo tiles,
    # all double-buffered by the default pipeline.
    resident = (2 * Ktot * Npad * itemsize
                + 2 * Npad * 4
                + 2 * P * Cin * itemsize)
    # per-row working set: double-buffered x / out tiles + f32 accumulator.
    per_row = 2 * Cin * itemsize + 2 * Npad * itemsize + Npad * 4

    # --- pick TQ from the byte footprint, not a fixed small tile -------------
    tile_budget = min(16 << 20, vmem_ceiling // 2)
    if block_q is None:
        tq = max(P, (tile_budget - resident) // max(1, per_row))
    else:
        tq = max(P, int(block_q))
    tq = max(P, (tq // P) * P)             # TQ must be a multiple of P (and 8)
    if B >= 2:
        t_cap = _round_up(T, P)
    else:
        # keep >= 2 grid steps so the parallel axes can use both v7x TCs
        t_cap = max(P, _round_up(_cdiv(T, 2), P))
    TQ = min(tq, t_cap)
    nT = _cdiv(T, TQ)                      # ragged last tile handled by Pallas
    ratio = TQ // P

    vmem_est = resident + TQ * per_row
    vmem_limit = int(min(vmem_ceiling, max(32 << 20, 2 * vmem_est)))

    kernel = _make_kernel(n_taps, Cin, TQ, P)

    out_packed = pl.pallas_call(
        kernel,
        out_shape=jax.ShapeDtypeStruct((B, T, Npad), dtype),
        grid=(B, nT),
        in_specs=[
            # current time-tile of x
            pl.BlockSpec((1, TQ, Cin), lambda b, t: (b, t, 0)),
            # last P rows of the previous tile (same HBM array, shifted view;
            # clamped to tile 0 and masked to zero inside the kernel at t == 0)
            pl.BlockSpec((1, P, Cin),
                         lambda b, t: (b, jnp.maximum(t * ratio - 1, 0), 0)),
            # fused weight / bias: constant index map -> resident in VMEM
            pl.BlockSpec((Ktot, Npad), lambda b, t: (0, 0)),
            pl.BlockSpec((1, Npad), lambda b, t: (0, 0)),
        ],
        out_specs=pl.BlockSpec((1, TQ, Npad), lambda b, t: (b, t, 0)),
        compiler_params=pltpu.CompilerParams(
            dimension_semantics=("parallel", "parallel"),
            vmem_limit_bytes=vmem_limit),
    )(x_blc, x_blc, w_comb, b_comb)

    # drop the lane padding + unpack phases: (B, T, Npad) -> (B, T*stride, Cout)
    out = out_packed[:, :, :N].reshape(B, T, stride, Cout)
    return out.reshape(B, T * stride, Cout)


def causal_conv_transpose_1d(x_ncl, weight, bias, stride, **kwargs):
    """PyTorch-layout compatibility shim: (B, C_in, T) -> (B, C_out, T*stride).

    The two transposes here are pure layout plumbing to match nn.ConvTranspose1d's
    NCL interface; channels-last pipelines should call
    causal_conv_transpose_1d_nlc directly and avoid them.
    """
    out_blc = causal_conv_transpose_1d_nlc(
        jnp.transpose(x_ncl, (0, 2, 1)), weight, bias, stride, **kwargs)
    return jnp.transpose(out_blc, (0, 2, 1))


def _reference(x_ncl, weight, bias, stride):
    """Pure-JAX reference of PyTorch ConvTranspose1d(padding=0) + causal crop."""
    B, Cin, T = x_ncl.shape
    _, Cout, K = weight.shape
    L_full = (T - 1) * stride + K
    out = jnp.zeros((B, Cout, L_full), jnp.float32)
    for i in range(T):
        contrib = jnp.einsum('bc,cdk->bdk', x_ncl[:, :, i], weight)
        out = out.at[:, :, i * stride:i * stride + K].add(contrib)
    out = out + bias[None, :, None]
    return out[:, :, :T * stride]


if __name__ == "__main__":
    # chan_in=8, chan_out=16, kernel_size=8, stride=4 (soundstream-style K=2*stride)
    B, Cin, Cout, K, stride, T = 2, 8, 16, 8, 4, 16

    key = jax.random.PRNGKey(0)
    kx, kw, kb = jax.random.split(key, 3)
    x = jax.random.normal(kx, (B, Cin, T), dtype=jnp.float32)
    # Deterministic synthetic parameters in PyTorch weight layout (Cin, Cout, K).
    fan = Cin * K
    weight = jax.random.uniform(kw, (Cin, Cout, K), jnp.float32,
                                minval=-1.0, maxval=1.0) / jnp.sqrt(fan)
    bias = jax.random.uniform(kb, (Cout,), jnp.float32,
                              minval=-1.0, maxval=1.0) / jnp.sqrt(fan)

    ref = _reference(x, weight, bias, stride)

    # Default path (auto-sized TQ -> one time-tile per batch at this size).
    out = jax.block_until_ready(causal_conv_transpose_1d(x, weight, bias, stride))
    assert out.shape == (B, Cout, T * stride), out.shape
    assert jnp.allclose(out, ref, atol=1e-4, rtol=1e-4), \
        float(jnp.max(jnp.abs(out - ref)))

    # Force multiple time-tiles per batch to exercise the cross-tile halo path.
    out2 = jax.block_until_ready(
        causal_conv_transpose_1d(x, weight, bias, stride, block_q=8))
    assert jnp.allclose(out2, ref, atol=1e-4, rtol=1e-4), \
        float(jnp.max(jnp.abs(out2 - ref)))

    print("KERNEL_OK")
</pallas_src>

<mosaic_0001>
module attributes {stable_mosaic.version = 11 : i64} {
  func.func @kernel(%arg0: i32, %arg1: i32, %arg2: memref<1x16x8xf32, #tpu.memory_space<vmem>>, %arg3: memref<1x8x8xf32, #tpu.memory_space<vmem>>, %arg4: memref<16x128xf32, #tpu.memory_space<vmem>>, %arg5: memref<1x128xf32, #tpu.memory_space<vmem>>, %arg6: memref<1x16x128xf32, #tpu.memory_space<vmem>>) attributes {dimension_semantics = [#tpu.dimension_semantics<parallel>, #tpu.dimension_semantics<parallel>], iteration_bounds = array<i64: 2, 1>, scalar_prefetch = 0 : i64, scratch_operands = 0 : i64, tpu.core_type = #tpu.core_type<tc>, window_params = [{transform_indices = @transform_0, window_bounds = array<i64: 1, 16, 8>}, {transform_indices = @transform_1, window_bounds = array<i64: 1, 8, 8>}, {pipeline_mode = #tpu.pipeline_mode<synchronous>, transform_indices = @transform_2, window_bounds = array<i64: 16, 128>}, {pipeline_mode = #tpu.pipeline_mode<synchronous>, transform_indices = @transform_3, window_bounds = array<i64: 1, 128>}, {transform_indices = @transform_4, window_bounds = array<i64: 1, 16, 128>}]} {
    %c0 = arith.constant 0 : index
    %c0_0 = arith.constant 0 : index
    %c0_1 = arith.constant 0 : index
    %0 = vector.load %arg2[%c0, %c0_0, %c0_1] : memref<1x16x8xf32, #tpu.memory_space<vmem>>, vector<1x16x8xf32>
    %1 = vector.shape_cast %0 : vector<1x16x8xf32> to vector<16x8xf32>
    %c0_2 = arith.constant 0 : index
    %c0_3 = arith.constant 0 : index
    %2 = vector.load %arg4[%c0_2, %c0_3] : memref<16x128xf32, #tpu.memory_space<vmem>>, vector<8x128xf32>
    %cst = arith.constant dense<0.000000e+00> : vector<16x128xf32>
    %3 = tpu.matmul %1, %2, %cst {dimension_numbers = #tpu.dot_dimension_numbers<[1], [0], [0], [1], [0, 0, 1, 1], [], []>} : vector<16x8xf32>, vector<8x128xf32>, vector<16x128xf32> -> vector<16x128xf32>
    %c0_4 = arith.constant 0 : index
    %c0_5 = arith.constant 0 : index
    %c0_6 = arith.constant 0 : index
    %4 = vector.load %arg3[%c0_4, %c0_5, %c0_6] : memref<1x8x8xf32, #tpu.memory_space<vmem>>, vector<1x8x8xf32>
    %5 = vector.shape_cast %4 : vector<1x8x8xf32> to vector<8x8xf32>
    %c0_i32 = arith.constant 0 : i32
    %6 = arith.cmpi sgt, %arg1, %c0_i32 : i32
    %cst_7 = arith.constant 0.000000e+00 : f32
    %7 = vector.broadcast %cst_7 : f32 to vector<8x8xf32>
    %8 = arith.select %6, %5, %7 : vector<8x8xf32>
    %9 = vector.extract_strided_slice %8 {offsets = [7, 0], sizes = [1, 8], strides = [1, 1]} : vector<8x8xf32> to vector<1x8xf32>
    %10 = vector.extract_strided_slice %1 {offsets = [0, 0], sizes = [15, 8], strides = [1, 1]} : vector<16x8xf32> to vector<15x8xf32>
    %11 = tpu.concatenate %9, %10 in 0 : vector<1x8xf32>, vector<15x8xf32> -> vector<16x8xf32>
    %c8 = arith.constant 8 : index
    %c0_8 = arith.constant 0 : index
    %12 = vector.load %arg4[%c8, %c0_8] : memref<16x128xf32, #tpu.memory_space<vmem>>, vector<8x128xf32>
    %cst_9 = arith.constant dense<0.000000e+00> : vector<16x128xf32>
    %13 = tpu.matmul %11, %12, %cst_9 {dimension_numbers = #tpu.dot_dimension_numbers<[1], [0], [0], [1], [0, 0, 1, 1], [], []>} : vector<16x8xf32>, vector<8x128xf32>, vector<16x128xf32> -> vector<16x128xf32>
    %14 = arith.addf %3, %13 : vector<16x128xf32>
    %c0_10 = arith.constant 0 : index
    %c0_11 = arith.constant 0 : index
    %15 = vector.load %arg5[%c0_10, %c0_11] : memref<1x128xf32, #tpu.memory_space<vmem>>, vector<1x128xf32>
    %16 = vector.broadcast %15 : vector<1x128xf32> to vector<16x128xf32>
    %17 = arith.addf %14, %16 : vector<16x128xf32>
    %c0_12 = arith.constant 0 : index
    %c0_13 = arith.constant 0 : index
    %c0_14 = arith.constant 0 : index
    %18 = vector.load %arg6[%c0_12, %c0_13, %c0_14] : memref<1x16x128xf32, #tpu.memory_space<vmem>>, vector<1x16x128xf32>
    %19 = vector.shape_cast %18 : vector<1x16x128xf32> to vector<16x128xf32>
    %20 = vector.shape_cast %17 : vector<16x128xf32> to vector<1x16x128xf32>
    tpu.vector_store %arg6[%c0_12, %c0_13, %c0_14], %20 {strides = array<i32>} : memref<1x16x128xf32, #tpu.memory_space<vmem>>, vector<1x16x128xf32>,
    return
  }
  func.func @transform_0(%arg0: i32, %arg1: i32) -> (i32, i32, i32) {
    %c0_i32 = arith.constant 0 : i32
    %c0_i32_0 = arith.constant 0 : i32
    return %arg0, %arg1, %c0_i32 : i32, i32, i32
  }
  func.func @transform_1(%arg0: i32, %arg1: i32) -> (i32, i32, i32) {
    %c2_i32 = arith.constant 2 : i32
    %0 = arith.muli %arg1, %c2_i32 : i32
    %c1_i32 = arith.constant 1 : i32
    %1 = arith.subi %0, %c1_i32 : i32
    %c0_i32 = arith.constant 0 : i32
    %2 = arith.maxsi %1, %c0_i32 : i32
    %c0_i32_0 = arith.constant 0 : i32
    %c0_i32_1 = arith.constant 0 : i32
    return %arg0, %2, %c0_i32_0 : i32, i32, i32
  }
  func.func @transform_2(%arg0: i32, %arg1: i32) -> (i32, i32) {
    %c0_i32 = arith.constant 0 : i32
    %c0_i32_0 = arith.constant 0 : i32
    %c0_i32_1 = arith.constant 0 : i32
    return %c0_i32, %c0_i32_0 : i32, i32
  }
  func.func @transform_3(%arg0: i32, %arg1: i32) -> (i32, i32) {
    %c0_i32 = arith.constant 0 : i32
    %c0_i32_0 = arith.constant 0 : i32
    %c0_i32_1 = arith.constant 0 : i32
    return %c0_i32, %c0_i32_0 : i32, i32
  }
  func.func @transform_4(%arg0: i32, %arg1: i32) -> (i32, i32, i32) {
    %c0_i32 = arith.constant 0 : i32
    %c0_i32_0 = arith.constant 0 : i32
    return %arg0, %arg1, %c0_i32 : i32, i32, i32
  }
}

</mosaic_0001>

<llo_original>
// kernel: tpu_custom_call.1
$region0: #{tpu_custom_call.1}
  #allocation0 [shape = 'u32[]', space=smem, size = 0x4, offset = 0x4, fixed_abs, tag = 'smem constant byte address 0x4 - core index']
  #allocation1 [shape = 'u32[144,128]{1,0:T(1,128)}', space=vmem, size = 0x12000, scoped, tag = 'internal scratch']
  %s0 = inlined_call_operand.vmem [shape: f32[2,16,8], index: 0, kind: input, shape index: {}]
  %s1 = inlined_call_operand.vmem [shape: f32[2,16,8], index: 1, kind: input, shape index: {}]
  %s2 = inlined_call_operand.vmem [shape: f32[16,128], index: 2, kind: input, shape index: {}]
  %s3 = inlined_call_operand.vmem [shape: f32[1,128], index: 3, kind: input, shape index: {}]
  %s4 = inlined_call_operand.hbm [shape: f32[2,16,128], index: 4, kind: output, shape index: {}]
  %s5 = sld [smem:[#allocation0]]
  $region49: #{tpu_custom_call.1} parent=0
    _
  %s7 = ssub.s32 1, %s5
  %s8 = scalar_select 0, %s7, %s5
  $region1: #{tpu_custom_call.1} parent=0
    #allocation2 [shape = 'u8[16384]{0}', space=vmem, size = 0x4000, scoped, tag = 'output window, operand 0']
    #allocation3 [shape = 's32[2]{0}', space=sflag, size = 0x8, scoped, tag = 'scoped memory for tpu_custom_call.1']
    %9 = vsyncpa [#allocation3], 0
    %s10 = scalar_lea.sflag [#allocation3], 1
    %11 = vsyncpa %s10, 0
    loop: start=0, step=1, limit=4
    $region2: #{tpu_custom_call.1} parent=1 // loop_pre_header
      _
    $region3: #{tpu_custom_call.1} parent=1 // loop_header
      %s13 = sphi 0, %s17
      %p14 = scmp.ge.s32.totalorder %s13, 4
      %s20 = sphi 0, %s32
      %s21 = sphi 0, %s28
      %s22 = sphi 0, %s20
      %s23 = sphi 0, %s21
      %s24 = sphi 0, %s22
      %s25 = sphi 0, %s23
      %s37 = sphi 0, %s39
      %s40 = sphi 0, %s37
      %s41 = sphi 0, %s40
      %s57 = sphi 0, %s41
      %s73 = sphi 0, %s75
      %s76 = sphi 0, %s73
      %s77 = sphi 0, %s76
      %s93 = sphi 0, %s77
      %s97 = sphi 0, %s97
      %s99 = sphi 0, %s97
      %s100 = sphi 0, %s99
      %s114 = sphi 0, %s100
      %s118 = sphi 0, %s118
      %s120 = sphi 0, %s118
      %s121 = sphi 0, %s120
      %s135 = sphi 0, %s121
      %s143 = sphi 0, %s145
      %s146 = sphi 0, %s143
      %s147 = sphi 0, %s146
      %s163 = sphi 0, %s147
    $region4: #{tpu_custom_call.1} parent=1 // loop_header_branch
      %16 = sbr.rel (%p14) target = $region8
    $region5: #{tpu_custom_call.1} parent=1 // loop_body
      %s18 = ssub.s32 %s13, 1
      %s19 = ssub.s32 %s13, 2
      %s26 = sadd.s32 1, %s21
      %p27 = scmp.ge.s32.totalorder %s26, 1
      %s28 = scalar_select %p27, 0, %s26
      %s29 = sadd.s32 1, %s20
      %s30 = scalar_select %p27, %s29, %s20
      %p31 = scmp.ge.s32.totalorder %s30, 2
      %s32 = scalar_select %p31, 0, %s30
      %s33 = ssub.s32 %s20, %s32
      %s34 = ssub.s32 %s21, %s28
      %s35 = sor.u32 %s33, %s34
      %p36 = scmp.eq.s32.totalorder %s35, 0
      %s38 = sadd.s32 %s37, 1
      %s39 = scalar_select %p36, %s37, %s38
      %p42 = pneg %p36
      %p43 = scmp.eq.s32.totalorder %s13, 1
      %p44 = por %p42, %p43
      %p45 = scmp.ne.s32.totalorder %s37, %s40
      %p46 = scmp.eq.s32.totalorder %s13, 0
      %p47 = por %p45, %p46
      %p48 = scmp.ne.s32.totalorder %s37, %s40
      %p49 = scmp.eq.s32.totalorder %s18, 1
      %p50 = por %p48, %p49
      %p51 = scmp.ne.s32.totalorder %s40, %s41
      %p52 = scmp.eq.s32.totalorder %s18, 0
      %p53 = por %p51, %p52
      %p54 = scmp.ne.s32.totalorder %s40, %s41
      %p55 = scmp.eq.s32.totalorder %s19, 1
      %p56 = por %p54, %p55
      %p58 = scmp.ne.s32.totalorder %s41, %s57
      %p59 = scmp.eq.s32.totalorder %s19, 0
      %p60 = por %p58, %p59
      %s61 = smul.u32 %s21, 2
      %s62 = ssub.s32 %s61, 1
      %p63 = scmp.gt.s32.totalorder %s62, 0
      %s64 = scalar_select %p63, %s62, 0
      %s65 = smul.u32 %s28, 2
      %s66 = ssub.s32 %s65, 1
      %p67 = scmp.gt.s32.totalorder %s66, 0
      %s68 = scalar_select %p67, %s66, 0
      %s69 = ssub.s32 %s20, %s32
      %s70 = ssub.s32 %s64, %s68
      %s71 = sor.u32 %s69, %s70
      %p72 = scmp.eq.s32.totalorder %s71, 0
      %s74 = sadd.s32 %s73, 1
      %s75 = scalar_select %p72, %s73, %s74
      %p78 = pneg %p72
      %p79 = scmp.eq.s32.totalorder %s13, 1
      %p80 = por %p78, %p79
      %p81 = scmp.ne.s32.totalorder %s73, %s76
      %p82 = scmp.eq.s32.totalorder %s13, 0
      %p83 = por %p81, %p82
      %p84 = scmp.ne.s32.totalorder %s73, %s76
      %p85 = scmp.eq.s32.totalorder %s18, 1
      %p86 = por %p84, %p85
      %p87 = scmp.ne.s32.totalorder %s76, %s77
      %p88 = scmp.eq.s32.totalorder %s18, 0
      %p89 = por %p87, %p88
      %p90 = scmp.ne.s32.totalorder %s76, %s77
      %p91 = scmp.eq.s32.totalorder %s19, 1
      %p92 = por %p90, %p91
      %p94 = scmp.ne.s32.totalorder %s77, %s93
      %p95 = scmp.eq.s32.totalorder %s19, 0
      %p96 = por %p94, %p95
      %s98 = sadd.s32 %s97, 1
      %p101 = scmp.eq.s32.totalorder %s13, 1
      %p102 = scmp.ne.s32.totalorder %s97, %s99
      %p103 = scmp.eq.s32.totalorder %s13, 0
      %p104 = por %p102, %p103
      %p105 = scmp.ne.s32.totalorder %s97, %s99
      %p106 = scmp.eq.s32.totalorder %s18, 1
      %p107 = por %p105, %p106
      %p108 = scmp.ne.s32.totalorder %s99, %s100
      %p109 = scmp.eq.s32.totalorder %s18, 0
      %p110 = por %p108, %p109
      %p111 = scmp.ne.s32.totalorder %s99, %s100
      %p112 = scmp.eq.s32.totalorder %s19, 1
      %p113 = por %p111, %p112
      %p115 = scmp.ne.s32.totalorder %s100, %s114
      %p116 = scmp.eq.s32.totalorder %s19, 0
      %p117 = por %p115, %p116
      %s119 = sadd.s32 %s118, 1
      %p122 = scmp.eq.s32.totalorder %s13, 1
      %p123 = scmp.ne.s32.totalorder %s118, %s120
      %p124 = scmp.eq.s32.totalorder %s13, 0
      %p125 = por %p123, %p124
      %p126 = scmp.ne.s32.totalorder %s118, %s120
      %p127 = scmp.eq.s32.totalorder %s18, 1
      %p128 = por %p126, %p127
      %p129 = scmp.ne.s32.totalorder %s120, %s121
      %p130 = scmp.eq.s32.totalorder %s18, 0
      %p131 = por %p129, %p130
      %p132 = scmp.ne.s32.totalorder %s120, %s121
      %p133 = scmp.eq.s32.totalorder %s19, 1
      %p134 = por %p132, %p133
      %p136 = scmp.ne.s32.totalorder %s121, %s135
      %p137 = scmp.eq.s32.totalorder %s19, 0
      %p138 = por %p136, %p137
      %s139 = ssub.s32 %s20, %s32
      %s140 = ssub.s32 %s21, %s28
      %s141 = sor.u32 %s139, %s140
      %p142 = scmp.eq.s32.totalorder %s141, 0
      %s144 = sadd.s32 %s143, 1
      %s145 = scalar_select %p142, %s143, %s144
      %p148 = pneg %p142
      %p149 = scmp.eq.s32.totalorder %s13, 1
      %p150 = por %p148, %p149
      %p151 = scmp.ne.s32.totalorder %s143, %s146
      %p152 = scmp.eq.s32.totalorder %s13, 0
      %p153 = por %p151, %p152
      %p154 = scmp.ne.s32.totalorder %s143, %s146
      %p155 = scmp.eq.s32.totalorder %s18, 1
      %p156 = por %p154, %p155
      %p157 = scmp.ne.s32.totalorder %s146, %s147
      %p158 = scmp.eq.s32.totalorder %s18, 0
      %p159 = por %p157, %p158
      %p160 = scmp.ne.s32.totalorder %s146, %s147
      %p161 = scmp.eq.s32.totalorder %s19, 1
      %p162 = por %p160, %p161
      %p164 = scmp.ne.s32.totalorder %s147, %s163
      %p165 = scmp.eq.s32.totalorder %s19, 0
      %p166 = por %p164, %p165
      %p167 = scmp.le.s32.totalorder 1, %s13
      %p168 = scmp.lt.s32.totalorder %s13, 3
      %p169 = pnand %p167, %p168
      %p170 = pneg %p169
      // Predicated region
      $region9: #{tpu_custom_call.1} parent=5 // pred_check
        _
      $region10: #{tpu_custom_call.1} parent=5 // pred_check_branch
        %172 = sbr.rel (%p169) target = $region12
      $region11: #{tpu_custom_call.1} parent=5 // pred_region
        %s173 = ssub.s32 %s13, 1
        // Predicated region
        $region13: #{tpu_custom_call.1} parent=11 // pred_check
          %p174 = pneg %p110
        $region14: #{tpu_custom_call.1} parent=11 // pred_check_branch
          %176 = sbr.rel (%p174) target = $region16
        $region15: #{tpu_custom_call.1} parent=11 // pred_region
          _
        $region16: #{tpu_custom_call.1} parent=11 // pred_fallthru
          _
        // Predicated region
        $region17: #{tpu_custom_call.1} parent=11 // pred_check
          %p177 = pneg %p131
        $region18: #{tpu_custom_call.1} parent=11 // pred_check_branch
          %179 = sbr.rel (%p177) target = $region20
        $region19: #{tpu_custom_call.1} parent=11 // pred_region
          _
        $region20: #{tpu_custom_call.1} parent=11 // pred_fallthru
          _
      $region12: #{tpu_custom_call.1} parent=5 // pred_fallthru
        _
      %p180 = scmp.lt.s32.totalorder %s13, 2
      // Predicated region
      $region21: #{tpu_custom_call.1} parent=5 // pred_check
        %p181 = pneg %p180
      $region22: #{tpu_custom_call.1} parent=5 // pred_check_branch
        %183 = sbr.rel (%p181) target = $region24
      $region23: #{tpu_custom_call.1} parent=5 // pred_region
        // Predicated region
        $region25: #{tpu_custom_call.1} parent=23 // pred_check
          %p184 = pneg %p47
        $region26: #{tpu_custom_call.1} parent=23 // pred_check_branch
          %186 = sbr.rel (%p184) target = $region28
        $region27: #{tpu_custom_call.1} parent=23 // pred_region
          %s187 = smul.u32 2, %s21
          %p188 = scmp.lt.s32.totalorder %s20, 1
          %s189 = scalar_select %p188, %s20, 1
          %p190 = scmp.lt.s32.totalorder %s187, 1
          %s191 = scalar_select %p190, %s187, 1
          %s192 = smul.addr %s189, 2
          %s193 = sadd.s32 %s191, %s192
          %s194 = smul.addr %s193, 8
          %s195 = scalar_lea.vmem %s0, %s194
          %s196 = smul.u32 2, %s21
        $region28: #{tpu_custom_call.1} parent=23 // pred_fallthru
          _
        // Predicated region
        $region29: #{tpu_custom_call.1} parent=23 // pred_check
          %p197 = pneg %p83
        $region30: #{tpu_custom_call.1} parent=23 // pred_check_branch
          %199 = sbr.rel (%p197) target = $region32
        $region31: #{tpu_custom_call.1} parent=23 // pred_region
          %s200 = smul.u32 %s21, 2
          %s201 = ssub.s32 %s200, 1
          %p202 = scmp.gt.s32.totalorder %s201, 0
          %s203 = scalar_select %p202, %s201, 0
          %p204 = scmp.lt.s32.totalorder %s20, 1
          %s205 = scalar_select %p204, %s20, 1
          %p206 = scmp.lt.s32.totalorder %s203, 1
          %s207 = scalar_select %p206, %s203, 1
          %s208 = smul.addr %s205, 2
          %s209 = sadd.s32 %s207, %s208
          %s210 = smul.addr %s209, 8
          %s211 = scalar_lea.vmem %s1, %s210
          %s212 = smul.u32 %s21, 2
          %s213 = ssub.s32 %s212, 1
          %p214 = scmp.gt.s32.totalorder %s213, 0
          %s215 = scalar_select %p214, %s213, 0
        $region32: #{tpu_custom_call.1} parent=23 // pred_fallthru
          _
      $region24: #{tpu_custom_call.1} parent=5 // pred_fallthru
        _
      %p216 = scmp.le.s32.totalorder 1, %s13
      %p217 = scmp.lt.s32.totalorder %s13, 3
      %p218 = pnand %p216, %p217
      %p219 = pneg %p218
      // Predicated region
      $region33: #{tpu_custom_call.1} parent=5 // pred_check
        _
      $region34: #{tpu_custom_call.1} parent=5 // pred_check_branch
        %221 = sbr.rel (%p218) target = $region36
      $region35: #{tpu_custom_call.1} parent=5 // pred_region
        %s222 = ssub.s32 %s13, 1
        %s223 = smul.u32 2, %s23
        %p224 = scmp.lt.s32.totalorder %s22, 1
        %s225 = scalar_select %p224, %s22, 1
        %p226 = scmp.lt.s32.totalorder %s223, 1
        %s227 = scalar_select %p226, %s223, 1
        %s228 = smul.addr %s225, 2
        %s229 = sadd.s32 %s227, %s228
        %s230 = smul.addr %s229, 8
        %s231 = scalar_lea.vmem %s0, %s230
        %p232 = pneg %p53
        %p233 = pneg %p50
        %s234 = smul.u32 %s23, 2
        %s235 = ssub.s32 %s234, 1
        %p236 = scmp.gt.s32.totalorder %s235, 0
        %s237 = scalar_select %p236, %s235, 0
        %p238 = scmp.lt.s32.totalorder %s22, 1
        %s239 = scalar_select %p238, %s22, 1
        %p240 = scmp.lt.s32.totalorder %s237, 1
        %s241 = scalar_select %p240, %s237, 1
        %s242 = smul.addr %s239, 2
        %s243 = sadd.s32 %s241, %s242
        %s244 = smul.addr %s243, 8
        %s245 = scalar_lea.vmem %s1, %s244
        %p246 = pneg %p89
        %p247 = pneg %p86
        %p248 = pneg %p110
        %p249 = pneg %p107
        %p250 = pneg %p131
        %p251 = pneg %p128
        %p252 = pneg %p159
        %p253 = pneg %p156
        %s254 = sand.u32 %s146, 1
        %s255 = scalar_lea.sflag [#allocation3], %s254
        %s256 = sand.u32 %s146, 1
        %s257 = smul.addr %s256, 16
        %s258 = scalar_lea.vmem [#allocation2], %s257
        %s259 = smul.u32 2, %s23
        %p260 = scmp.lt.s32.totalorder %s22, 1
        %s261 = scalar_select %p260, %s22, 1
        %p262 = scmp.lt.s32.totalorder %s259, 1
        %s263 = scalar_select %p262, %s259, 1
        %s264 = smul.addr %s261, 2
        %s265 = sadd.s32 %s263, %s264
        %s266 = smul.addr %s265, 8
        %s267 = scalar_lea.vmem %s0, %s266
        %s268 = smul.u32 2, %s23
        %s269 = smul.u32 %s23, 2
        %s270 = ssub.s32 %s269, 1
        %p271 = scmp.gt.s32.totalorder %s270, 0
        %s272 = scalar_select %p271, %s270, 0
        %p273 = scmp.lt.s32.totalorder %s22, 1
        %s274 = scalar_select %p273, %s22, 1
        %p275 = scmp.lt.s32.totalorder %s272, 1
        %s276 = scalar_select %p275, %s272, 1
        %s277 = smul.addr %s274, 2
        %s278 = sadd.s32 %s276, %s277
        %s279 = smul.addr %s278, 8
        %s280 = scalar_lea.vmem %s1, %s279
        %s281 = smul.u32 %s23, 2
        %s282 = ssub.s32 %s281, 1
        %p283 = scmp.gt.s32.totalorder %s282, 0
        %s284 = scalar_select %p283, %s282, 0
        %s285 = smul.u32 2, %s23
        %v286 = vld [vmem:[%s267] sm:$0xff]
        %v287 = vld [vmem:[%s267 + $0x8] sm:$0xff]
        %v288 = vld [vmem:[%s2] sm:$0xff]
        %v289 = vld [vmem:[%s280] sm:$0xff]
        %p290 = scmp.gt.s32.totalorder %s23, 0
        %s291 = scalar_select %p290, 1, 0
        %v292 = vstv %s291
        %vm293 = vcmp.eq.s32.totalorder %v292, 1
        %v294 = vsel %vm293, %v289, 0.0
        %v296 = vrot.slane %v294, 7
        %vm300 = vcmask 1040384
        %v301 = vrot.slane %v286, 7
        %v302 = vrot.slane %v287, 7
        %v303 = vsel %vm300, %v301, %v302
        %v305 = vsel %vm300, %v296, %v301
        %v306 = vld [vmem:[%s2 + $0x8] sm:$0xff]
        %vm307 = vcmask 64512
        %v309 = vsel %vm307, %v305, 0
        %v311 = vsel %vm307, %v303, 0
        %313 = vmatprep.subr.mxu0 0.0
        %314 = vmatpush1.msra.mxu0 %v306
        %315 = vmatprep.subr.mxu0 0.0
        %316 = vmatpush1.msra.mxu0 0.0
        %317 = vmatprep.subr.mxu0 0.0
        %318 = vmatpush1.msra.mxu0 0.0
        %319 = vmatprep.subr.mxu0 0.0
        %320 = vmatpush1.msra.mxu0 0.0
        %321 = vmatprep.subr.mxu0 0.0
        %322 = vmatpush1.msra.mxu0 0.0
        %323 = vmatprep.subr.mxu0 0.0
        %324 = vmatpush1.msra.mxu0 0.0
        %325 = vmatprep.subr.mxu0 0.0
        %326 = vmatpush1.msra.mxu0 0.0
        %327 = vmatprep.subr.mxu0 0.0
        %328 = vmatpush1.msra.mxu0 0.0
        %329 = vmatprep.subr.mxu0 0.0
        %330 = vmatpush1.msra.mxu0 0.0
        %331 = vmatprep.subr.mxu0 0.0
        %332 = vmatpush1.msra.mxu0 0.0
        %333 = vmatprep.subr.mxu0 0.0
        %334 = vmatpush1.msra.mxu0 0.0
        %335 = vmatprep.subr.mxu0 0.0
        %336 = vmatpush1.msra.mxu0 0.0
        %337 = vmatprep.subr.mxu0 0.0
        %338 = vmatpush1.msra.mxu0 0.0
        %339 = vmatprep.subr.mxu0 0.0
        %340 = vmatpush1.msra.mxu0 0.0
        %341 = vmatprep.subr.mxu0 0.0
        %342 = vmatpush1.msra.mxu0 0.0
        %343 = vmatprep.subr.mxu0 0.0
        %344 = vmatpush1.msra.mxu0 0.0
        %345 = vmatprep.subr.mxu0 0.0
        %346 = vmatpush1.msra.mxu0 0.0
        %347 = vmatprep.subr.mxu0 0.0
        %348 = vmatpush1.msra.mxu0 0.0
        %349 = vmatprep.subr.mxu0 0.0
        %350 = vmatpush1.msra.mxu0 0.0
        %351 = vmatprep.subr.mxu0 0.0
        %352 = vmatpush1.msra.mxu0 0.0
        %353 = vmatprep.subr.mxu0 0.0
        %354 = vmatpush1.msra.mxu0 0.0
        %355 = vmatprep.subr.mxu0 0.0
        %356 = vmatpush1.msra.mxu0 0.0
        %357 = vmatprep.subr.mxu0 0.0
        %358 = vmatpush1.msra.mxu0 0.0
        %359 = vmatprep.subr.mxu0 0.0
        %360 = vmatpush1.msra.mxu0 0.0
        %361 = vmatprep.subr.mxu0 0.0
        %362 = vmatpush1.msra.mxu0 0.0
        %363 = vmatprep.subr.mxu0 0.0
        %364 = vmatpush1.msra.mxu0 0.0
        %365 = vmatprep.subr.mxu0 0.0
        %366 = vmatpush1.msra.mxu0 0.0
        %367 = vmatprep.subr.mxu0 0.0
        %368 = vmatpush1.msra.mxu0 0.0
        %369 = vmatprep.subr.mxu0 0.0
        %370 = vmatpush1.msra.mxu0 0.0
        %371 = vmatprep.subr.mxu0 0.0
        %372 = vmatpush1.msra.mxu0 0.0
        %373 = vmatprep.subr.mxu0 0.0
        %374 = vmatpush1.msra.mxu0 0.0
        %375 = vmatprep.subr.mxu0 0.0
        %376 = vmatpush1.msra.mxu0 0.0
        %377 = vmatprep.mubr.f32.mxu0 0.0
        %378 = vmatmul.mubr.f32.gmra.mrb[0].mxu0 %v309
        %v379 = vpop.f32.mrb[0].mxu0
        %v380 = vadd.f32 0.0, %v379
        %v381 = vpop.f32.mrb[0].mxu0
        %382 = vmatprep.mubr.f32.mxu0 0.0
        %383 = vmatmul.mubr.f32.gmra.mrb[0].mxu0 %v311
        %v384 = vpop.f32.mrb[0].mxu0
        %v385 = vadd.f32 0.0, %v384
        %v386 = vpop.f32.mrb[0].mxu0
        %387 = vdwg.mxu0
        %v388 = vsel %vm307, %v286, 0
        %v390 = vsel %vm307, %v287, 0
        %392 = vmatprep.subr.mxu0 0.0
        %393 = vmatpush1.msra.mxu0 %v288
        %394 = vmatprep.subr.mxu0 0.0
        %395 = vmatpush1.msra.mxu0 0.0
        %396 = vmatprep.subr.mxu0 0.0
        %397 = vmatpush1.msra.mxu0 0.0
        %398 = vmatprep.subr.mxu0 0.0
        %399 = vmatpush1.msra.mxu0 0.0
        %400 = vmatprep.subr.mxu0 0.0
        %401 = vmatpush1.msra.mxu0 0.0
        %402 = vmatprep.subr.mxu0 0.0
        %403 = vmatpush1.msra.mxu0 0.0
        %404 = vmatprep.subr.mxu0 0.0
        %405 = vmatpush1.msra.mxu0 0.0
        %406 = vmatprep.subr.mxu0 0.0
        %407 = vmatpush1.msra.mxu0 0.0
        %408 = vmatprep.subr.mxu0 0.0
        %409 = vmatpush1.msra.mxu0 0.0
        %410 = vmatprep.subr.mxu0 0.0
        %411 = vmatpush1.msra.mxu0 0.0
        %412 = vmatprep.subr.mxu0 0.0
        %413 = vmatpush1.msra.mxu0 0.0
        %414 = vmatprep.subr.mxu0 0.0
        %415 = vmatpush1.msra.mxu0 0.0
        %416 = vmatprep.subr.mxu0 0.0
        %417 = vmatpush1.msra.mxu0 0.0
        %418 = vmatprep.subr.mxu0 0.0
        %419 = vmatpush1.msra.mxu0 0.0
        %420 = vmatprep.subr.mxu0 0.0
        %421 = vmatpush1.msra.mxu0 0.0
        %422 = vmatprep.subr.mxu0 0.0
        %423 = vmatpush1.msra.mxu0 0.0
        %424 = vmatprep.subr.mxu0 0.0
        %425 = vmatpush1.msra.mxu0 0.0
        %426 = vmatprep.subr.mxu0 0.0
        %427 = vmatpush1.msra.mxu0 0.0
        %428 = vmatprep.subr.mxu0 0.0
        %429 = vmatpush1.msra.mxu0 0.0
        %430 = vmatprep.subr.mxu0 0.0
        %431 = vmatpush1.msra.mxu0 0.0
        %432 = vmatprep.subr.mxu0 0.0
        %433 = vmatpush1.msra.mxu0 0.0
        %434 = vmatprep.subr.mxu0 0.0
        %435 = vmatpush1.msra.mxu0 0.0
        %436 = vmatprep.subr.mxu0 0.0
        %437 = vmatpush1.msra.mxu0 0.0
        %438 = vmatprep.subr.mxu0 0.0
        %439 = vmatpush1.msra.mxu0 0.0
        %440 = vmatprep.subr.mxu0 0.0
        %441 = vmatpush1.msra.mxu0 0.0
        %442 = vmatprep.subr.mxu0 0.0
        %443 = vmatpush1.msra.mxu0 0.0
        %444 = vmatprep.subr.mxu0 0.0
        %445 = vmatpush1.msra.mxu0 0.0
        %446 = vmatprep.subr.mxu0 0.0
        %447 = vmatpush1.msra.mxu0 0.0
        %448 = vmatprep.subr.mxu0 0.0
        %449 = vmatpush1.msra.mxu0 0.0
        %450 = vmatprep.subr.mxu0 0.0
        %451 = vmatpush1.msra.mxu0 0.0
        %452 = vmatprep.subr.mxu0 0.0
        %453 = vmatpush1.msra.mxu0 0.0
        %454 = vmatprep.subr.mxu0 0.0
        %455 = vmatpush1.msra.mxu0 0.0
        %456 = vmatprep.mubr.f32.mxu0 0.0
        %457 = vmatmul.mubr.f32.gmra.mrb[0].mxu0 %v388
        %v458 = vpop.f32.mrb[0].mxu0
        %v459 = vadd.f32 %v380, %v458
        %v460 = vpop.f32.mrb[0].mxu0
        %461 = vmatprep.mubr.f32.mxu0 0.0
        %462 = vmatmul.mubr.f32.gmra.mrb[0].mxu0 %v390
        %v463 = vpop.f32.mrb[0].mxu0
        %v464 = vadd.f32 %v385, %v463
        %v465 = vpop.f32.mrb[0].mxu0
        %466 = vdwg.mxu0
        %v467 = vld [vmem:[%s3] sm:$0x1]
        %v469 = vlaneseq
        %v470 = vshrl.u32 %v469, 7
        %v471 = vsub.s32 0, %v470
        %v472 = vrot.slane %v467, %v471
        %v474 = vadd.f32 %v459, %v472
        %v475 = vadd.f32 %v464, %v472
        %476 = vst [vmem:[%s258] sm:$0xff] %v474
        %477 = vst [vmem:[%s258 + $0x8] sm:$0xff] %v475
        %s478 = sand.u32 %s146, 1
        %s479 = scalar_lea.sflag [#allocation3], %s478
        %s480 = sand.u32 %s146, 1
        %s481 = smul.addr %s480, 16
        %s482 = scalar_lea.vmem [#allocation2], %s481
        // Predicated region
        $region37: #{tpu_custom_call.1} parent=35 // pred_check
          %p483 = pneg %p156
        $region38: #{tpu_custom_call.1} parent=35 // pred_check_branch
          %485 = sbr.rel (%p483) target = $region40
        $region39: #{tpu_custom_call.1} parent=35 // pred_region
          %s486 = smul.u32 2, %s23
          %s488 = ssub.s32 256, 256
          %489 = vsyncadd %s479, %s488
          %s490 = smul.addr %s22, 2
          %s491 = sadd.s32 %s486, %s490
          %s492 = smul.addr %s491, 128
          %s493 = scalar_lea.hbm %s4, %s492
          %s494 = sshll.u32 %s482, 4
          %s495 = int_to_ptr.vmem [resolvable:$true] %s494
          %500 = dma.vmem_to_hbm [thread:$0]  %s495, 256, %s493, %s479, 128, 128, 8
        $region40: #{tpu_custom_call.1} parent=35 // pred_fallthru
          _
      $region36: #{tpu_custom_call.1} parent=5 // pred_fallthru
        _
      %p501 = scmp.le.s32.totalorder 2, %s13
      // Predicated region
      $region41: #{tpu_custom_call.1} parent=5 // pred_check
        %p502 = pneg %p501
      $region42: #{tpu_custom_call.1} parent=5 // pred_check_branch
        %504 = sbr.rel (%p502) target = $region44
      $region43: #{tpu_custom_call.1} parent=5 // pred_region
        %s505 = ssub.s32 %s13, 2
        // Predicated region
        $region45: #{tpu_custom_call.1} parent=43 // pred_check
          %p506 = pneg %p162
        $region46: #{tpu_custom_call.1} parent=43 // pred_check_branch
          %508 = sbr.rel (%p506) target = $region48
        $region47: #{tpu_custom_call.1} parent=43 // pred_region
          %s509 = sand.u32 %s147, 1
          %s510 = scalar_lea.sflag [#allocation3], %s509
          %s511 = sand.u32 %s147, 1
          %s512 = smul.addr %s511, 16
          %s513 = scalar_lea.vmem [#allocation2], %s512
          %514 = dma.done %s510, 256
        $region48: #{tpu_custom_call.1} parent=43 // pred_fallthru
          _
      $region44: #{tpu_custom_call.1} parent=5 // pred_fallthru
        _
    $region6: #{tpu_custom_call.1} parent=1 // loop_footer
      %s17 = sadd.s32 1, %s13
    $region7: #{tpu_custom_call.1} parent=1 // loop_footer_branch
      %12 = sbr.rel target = $region3
    $region8: #{tpu_custom_call.1} parent=1 // loop_exit
      _
    %515 = vsyncpa [#allocation3], 1
    %s516 = scalar_lea.sflag [#allocation3], 1
    %517 = vsyncpa %s516, 1

</llo_original>
